<compile_context>
chip_gen: v7x
topology: tpu7x:2x2x1
jax: 0.10.0
libtpu: 0.0.40
codegen_flags: <defaults>
</compile_context>

<pallas_src>
import jax
import jax.numpy as jnp
from jax.experimental import pallas as pl
from jax.experimental.pallas import tpu as pltpu


def _patch_mlp_kernel(x_ref, w1_ref, b1_ref, w2_ref, b2_ref, out_ref):
    # First layer for all three heads at once: (tm, C) @ (C, 3C) -> (tm, 3C).
    x = x_ref[...]
    h = jnp.dot(x, w1_ref[...], preferred_element_type=jnp.float32)
    h = jnp.maximum(h + b1_ref[...], 0.0)            # bias + ReLU in f32
    # Feed the tiny-N second matmul in the activation dtype: halves the VMEM
    # held by the (tm, 3C) intermediate when running bf16 (accumulation is f32).
    h = h.astype(x_ref.dtype)
    # Second layer, block-diagonal fused: (tm, 3C) @ (3C, 8) -> (tm, 8).
    y = jnp.dot(h, w2_ref[...], preferred_element_type=jnp.float32)
    out_ref[...] = (y + b2_ref[...]).astype(out_ref.dtype)


def init_patch_mlp_params(key, in_dim, dtype=jnp.float32):
    """Weights ~ trunc_normal(std=0.02), biases = 0 (matches the PyTorch init).
    Weights are stored (in, out) so the kernel computes x @ W (== x @ W_pt.T)."""
    def trunc_normal(k, shape, std=0.02):
        return (std * jax.random.truncated_normal(k, -2.0, 2.0, shape)).astype(dtype)

    params = {}
    for name, out_dim in (("cls", 2), ("cen", 1), ("box", 4)):
        key, k1, k2 = jax.random.split(key, 3)
        params[name] = dict(
            w1=trunc_normal(k1, (in_dim, in_dim)),
            b1=jnp.zeros((1, in_dim), jnp.float32),
            w2=trunc_normal(k2, (in_dim, out_dim)),
            b2=jnp.zeros((1, out_dim), jnp.float32),
        )
    return params


def fuse_patch_mlp_params(params, compute_dtype=None):
    """Fuse the three heads ONCE per parameter set (hoisted out of the forward):
    concatenate the W1s -> (C, 3C) and build a block-diagonal W2 -> (3C, 8).
    Output lane layout: [cls(2) | cen(1) | box(4) | pad(1)]."""
    C = params["cls"]["w1"].shape[0]
    w_dtype = compute_dtype if compute_dtype is not None else params["cls"]["w1"].dtype

    w1 = jnp.concatenate(
        [params["cls"]["w1"], params["cen"]["w1"], params["box"]["w1"]],
        axis=1).astype(w_dtype)                                             # (C, 3C)
    b1 = jnp.concatenate(
        [params["cls"]["b1"], params["cen"]["b1"], params["box"]["b1"]],
        axis=1).astype(jnp.float32)                                         # (1, 3C)

    w2 = jnp.zeros((3 * C, 8), jnp.float32)
    w2 = w2.at[0 * C:1 * C, 0:2].set(params["cls"]["w2"].astype(jnp.float32))
    w2 = w2.at[1 * C:2 * C, 2:3].set(params["cen"]["w2"].astype(jnp.float32))
    w2 = w2.at[2 * C:3 * C, 3:7].set(params["box"]["w2"].astype(jnp.float32))
    w2 = w2.astype(w_dtype)                                                 # (3C, 8)

    b2 = jnp.zeros((1, 8), jnp.float32)
    b2 = b2.at[:, 0:2].set(params["cls"]["b2"].astype(jnp.float32))
    b2 = b2.at[:, 2:3].set(params["cen"]["b2"].astype(jnp.float32))
    b2 = b2.at[:, 3:7].set(params["box"]["b2"].astype(jnp.float32))         # (1, 8)
    return dict(w1=w1, b1=b1, w2=w2, b2=b2)


def _round_up(a, b):
    return ((a + b - 1) // b) * b


def patch_mlp_forward(feat, fused, *, tm=1024,
                      vmem_budget_bytes=32 * 1024 * 1024, compute_dtype=None):
    """feat: (B, L, C) -> {'box': (B,L,4), 'cls': (B,L,2), 'cen': (B,L,1)}.

    `fused` is the result of fuse_patch_mlp_params (computed once per weight
    set).  `vmem_budget_bytes` defaults to 32 MiB, which fits every generation
    (v7x: 64 MiB physical per TC, v5e: 128 MiB physical / 16 MiB scoped default
    which we raise explicitly)."""
    B, L, C = feat.shape
    M = B * L
    out_dtype = feat.dtype

    x = feat.reshape(M, C)
    if compute_dtype is not None:
        x = x.astype(compute_dtype)     # halves HBM reads for bf16; accum stays f32
    w1, b1, w2, b2 = fused["w1"], fused["b1"], fused["w2"], fused["b2"]

    x_item = int(jnp.dtype(x.dtype).itemsize)
    out_item = int(jnp.dtype(out_dtype).itemsize)
    p_item = int(jnp.dtype(w1.dtype).itemsize)

    # Row-tile alignment: sublane quantum of the narrowest dtype in play
    # (8 rows for f32, 16 for bf16, 32 for int8).
    align = max(8, 32 // min(x_item, out_item))

    # ---- Explicit VMEM budget -> max row tile (so a v6e-tuned tm can't blow
    # past v7x's 64 MiB or v5e's 16 MiB scoped default). Per-row bytes: ----
    per_row = (
        2 * C * x_item          # double-buffered x tiles
        + C * x_item            # loaded x value (compiler temp headroom)
        + 3 * C * 4             # f32 (tm, 3C) hidden intermediate
        + 3 * C * x_item        # hidden cast back to activation dtype
        + 2 * 8 * out_item      # double-buffered output tiles
        + 8 * 4                 # f32 second-matmul result
    )
    # Constant weights are revisited every step (index_map -> (0, 0)) so they
    # are only DMA'd once, but the default pipeline still double-buffers them.
    w_bytes = 2 * (C * 3 * C + 3 * C + 3 * C * 8 + 8) * p_item
    avail = max(vmem_budget_bytes - w_bytes - (4 << 20), align * per_row)
    tm_cap = max((avail // per_row) // align * align, align)

    if M <= align:
        tm_eff = M                                   # one full-extent block
    else:
        tm_eff = min(_round_up(tm, align), _round_up(M, align), tm_cap)
        if M > 2 * align:
            # v7x megacore: keep the "parallel" grid at >= 2 steps so both
            # TensorCores get work; on v5e/v6e the extra step costs ~0.35 us.
            tm_eff = min(tm_eff, _round_up(pl.cdiv(M, 2), align))
        tm_eff = max(tm_eff, align)
    grid = (pl.cdiv(M, tm_eff),)                     # ragged last block, no jnp.pad

    est_vmem = w_bytes + tm_eff * per_row
    vmem_limit = int(min(max(vmem_budget_bytes, (5 * est_vmem) // 4),
                         128 * 1024 * 1024))

    cost = pl.CostEstimate(
        flops=2 * M * C * (3 * C) + 2 * M * (3 * C) * 8,
        transcendentals=0,
        bytes_accessed=M * C * x_item + M * 8 * out_item
        + (C * 3 * C + 3 * C * 8) * p_item + (3 * C + 8) * 4,
    )

    out = pl.pallas_call(
        _patch_mlp_kernel,
        out_shape=jax.ShapeDtypeStruct((M, 8), out_dtype),
        grid_spec=pltpu.PrefetchScalarGridSpec(
            num_scalar_prefetch=0,
            grid=grid,
            in_specs=[
                pl.BlockSpec((tm_eff, C), lambda i: (i, 0)),     # x row tile
                pl.BlockSpec((C, 3 * C), lambda i: (0, 0)),      # fused W1 (constant)
                pl.BlockSpec((1, 3 * C), lambda i: (0, 0)),      # fused b1 (constant)
                pl.BlockSpec((3 * C, 8), lambda i: (0, 0)),      # block-diag W2 (constant)
                pl.BlockSpec((1, 8), lambda i: (0, 0)),          # fused b2 (constant)
            ],
            out_specs=pl.BlockSpec((tm_eff, 8), lambda i: (i, 0)),
        ),
        compiler_params=pltpu.CompilerParams(
            dimension_semantics=("parallel",),
            vmem_limit_bytes=vmem_limit),
        cost_estimate=cost,
    )(x, w1, b1, w2, b2)

    return {
        "box": out[:, 3:7].reshape(B, L, 4),
        "cls": out[:, 0:2].reshape(B, L, 2),
        "cen": out[:, 2:3].reshape(B, L, 1),
    }


def _reference_forward(feat, params):
    """Pure-JAX reference matching the PyTorch MLP forward."""
    B, L, C = feat.shape
    x = feat.reshape(B * L, C).astype(jnp.float32)

    def head(p):
        h = jnp.maximum(x @ p["w1"].astype(jnp.float32) + p["b1"], 0.0)
        return h @ p["w2"].astype(jnp.float32) + p["b2"]

    return {
        "box": head(params["box"]).reshape(B, L, 4),
        "cls": head(params["cls"]).reshape(B, L, 2),
        "cen": head(params["cen"]).reshape(B, L, 1),
    }


if __name__ == "__main__":
    # Small shapes consistent with the module: feat (B, L, C), C = MODEL.HEAD.IN_DIM
    B, L, C = 2, 8, 32
    key = jax.random.PRNGKey(0)
    k_feat, k_params = jax.random.split(key)

    feat = jax.random.normal(k_feat, (B, L, C), dtype=jnp.float32)
    params = init_patch_mlp_params(k_params, C)

    # Hoisted fusion (done once per parameter set) + jitted forward, so the
    # concat/scatter that builds the fused weights is not paid per call.
    fused = fuse_patch_mlp_params(params)
    forward = jax.jit(patch_mlp_forward)

    out = forward(feat, fused)
    out = jax.tree_util.tree_map(jax.block_until_ready, out)

    ref = _reference_forward(feat, params)
    for name in ("box", "cls", "cen"):
        assert out[name].shape == ref[name].shape, (name, out[name].shape)
        assert jnp.allclose(out[name], ref[name], atol=1e-5, rtol=1e-5), name

    print("KERNEL_OK")
</pallas_src>

<mosaic_0001>
module attributes {stable_mosaic.version = 11 : i64} {
  func.func @_patch_mlp_kernel(%arg0: i32, %arg1: memref<16x32xf32, #tpu.memory_space<vmem>>, %arg2: memref<32x96xf32, #tpu.memory_space<vmem>>, %arg3: memref<1x96xf32, #tpu.memory_space<vmem>>, %arg4: memref<96x8xf32, #tpu.memory_space<vmem>>, %arg5: memref<1x8xf32, #tpu.memory_space<vmem>>, %arg6: memref<16x8xf32, #tpu.memory_space<vmem>>) attributes {dimension_semantics = [#tpu.dimension_semantics<parallel>], iteration_bounds = array<i64: 1>, scalar_prefetch = 0 : i64, scratch_operands = 0 : i64, tpu.core_type = #tpu.core_type<tc>, window_params = [{transform_indices = @transform_0, window_bounds = array<i64: 16, 32>}, {pipeline_mode = #tpu.pipeline_mode<synchronous>, transform_indices = @transform_1, window_bounds = array<i64: 32, 96>}, {pipeline_mode = #tpu.pipeline_mode<synchronous>, transform_indices = @transform_2, window_bounds = array<i64: 1, 96>}, {pipeline_mode = #tpu.pipeline_mode<synchronous>, transform_indices = @transform_3, window_bounds = array<i64: 96, 8>}, {pipeline_mode = #tpu.pipeline_mode<synchronous>, transform_indices = @transform_4, window_bounds = array<i64: 1, 8>}, {transform_indices = @transform_5, window_bounds = array<i64: 16, 8>}]} {
    %c0 = arith.constant 0 : index
    %c0_0 = arith.constant 0 : index
    %0 = vector.load %arg1[%c0, %c0_0] : memref<16x32xf32, #tpu.memory_space<vmem>>, vector<16x32xf32>
    %c0_1 = arith.constant 0 : index
    %c0_2 = arith.constant 0 : index
    %1 = vector.load %arg2[%c0_1, %c0_2] : memref<32x96xf32, #tpu.memory_space<vmem>>, vector<32x96xf32>
    %cst = arith.constant dense<0.000000e+00> : vector<16x96xf32>
    %2 = tpu.matmul %0, %1, %cst {dimension_numbers = #tpu.dot_dimension_numbers<[1], [0], [0], [1], [0, 0, 1, 1], [], []>} : vector<16x32xf32>, vector<32x96xf32>, vector<16x96xf32> -> vector<16x96xf32>
    %c0_3 = arith.constant 0 : index
    %c0_4 = arith.constant 0 : index
    %3 = vector.load %arg3[%c0_3, %c0_4] : memref<1x96xf32, #tpu.memory_space<vmem>>, vector<1x96xf32>
    %4 = vector.broadcast %3 : vector<1x96xf32> to vector<16x96xf32>
    %5 = arith.addf %2, %4 : vector<16x96xf32>
    %cst_5 = arith.constant 0.000000e+00 : f32
    %6 = vector.broadcast %cst_5 : f32 to vector<16x96xf32>
    %7 = arith.maximumf %5, %6 : vector<16x96xf32>
    %c0_6 = arith.constant 0 : index
    %c0_7 = arith.constant 0 : index
    %8 = vector.load %arg4[%c0_6, %c0_7] : memref<96x8xf32, #tpu.memory_space<vmem>>, vector<96x8xf32>
    %cst_8 = arith.constant dense<0.000000e+00> : vector<16x8xf32>
    %9 = tpu.matmul %7, %8, %cst_8 {dimension_numbers = #tpu.dot_dimension_numbers<[1], [0], [0], [1], [0, 0, 1, 1], [], []>} : vector<16x96xf32>, vector<96x8xf32>, vector<16x8xf32> -> vector<16x8xf32>
    %c0_9 = arith.constant 0 : index
    %c0_10 = arith.constant 0 : index
    %10 = vector.load %arg5[%c0_9, %c0_10] : memref<1x8xf32, #tpu.memory_space<vmem>>, vector<1x8xf32>
    %11 = vector.broadcast %10 : vector<1x8xf32> to vector<16x8xf32>
    %12 = arith.addf %9, %11 : vector<16x8xf32>
    %c0_11 = arith.constant 0 : index
    %c0_12 = arith.constant 0 : index
    %13 = vector.load %arg6[%c0_11, %c0_12] : memref<16x8xf32, #tpu.memory_space<vmem>>, vector<16x8xf32>
    tpu.vector_store %arg6[%c0_11, %c0_12], %12 {strides = array<i32>} : memref<16x8xf32, #tpu.memory_space<vmem>>, vector<16x8xf32>,
    return
  }
  func.func @transform_0(%arg0: i32) -> (i32, i32) {
    %c0_i32 = arith.constant 0 : i32
    %c0_i32_0 = arith.constant 0 : i32
    return %arg0, %c0_i32 : i32, i32
  }
  func.func @transform_1(%arg0: i32) -> (i32, i32) {
    %c0_i32 = arith.constant 0 : i32
    %c0_i32_0 = arith.constant 0 : i32
    %c0_i32_1 = arith.constant 0 : i32
    return %c0_i32, %c0_i32_0 : i32, i32
  }
  func.func @transform_2(%arg0: i32) -> (i32, i32) {
    %c0_i32 = arith.constant 0 : i32
    %c0_i32_0 = arith.constant 0 : i32
    %c0_i32_1 = arith.constant 0 : i32
    return %c0_i32, %c0_i32_0 : i32, i32
  }
  func.func @transform_3(%arg0: i32) -> (i32, i32) {
    %c0_i32 = arith.constant 0 : i32
    %c0_i32_0 = arith.constant 0 : i32
    %c0_i32_1 = arith.constant 0 : i32
    return %c0_i32, %c0_i32_0 : i32, i32
  }
  func.func @transform_4(%arg0: i32) -> (i32, i32) {
    %c0_i32 = arith.constant 0 : i32
    %c0_i32_0 = arith.constant 0 : i32
    %c0_i32_1 = arith.constant 0 : i32
    return %c0_i32, %c0_i32_0 : i32, i32
  }
  func.func @transform_5(%arg0: i32) -> (i32, i32) {
    %c0_i32 = arith.constant 0 : i32
    %c0_i32_0 = arith.constant 0 : i32
    return %arg0, %c0_i32 : i32, i32
  }
}

</mosaic_0001>

<llo_original>
// kernel: patch_mlp_forward.1
$region0: #{patch_mlp_forward.1}
  #allocation0 [shape = 'u32[]', space=smem, size = 0x4, offset = 0x4, fixed_abs, tag = 'smem constant byte address 0x4 - core index']
  #allocation1 [shape = 'u32[144,128]{1,0:T(1,128)}', space=vmem, size = 0x12000, scoped, tag = 'internal scratch']
  %s0 = inlined_call_operand.vmem [shape: f32[16,32], index: 0, kind: input, shape index: {}]
  %s1 = inlined_call_operand.vmem [shape: f32[32,96], index: 1, kind: input, shape index: {}]
  %s2 = inlined_call_operand.vmem [shape: f32[1,96], index: 2, kind: input, shape index: {}]
  %s3 = inlined_call_operand.vmem [shape: f32[96,8], index: 3, kind: input, shape index: {}]
  %s4 = inlined_call_operand.vmem [shape: f32[1,8], index: 4, kind: input, shape index: {}]
  %s5 = inlined_call_operand.vmem [shape: f32[16,8], index: 5, kind: output, shape index: {}]
  %s6 = sld [smem:[#allocation0]]
  $region30: #{patch_mlp_forward.1} parent=0
    _
  %s8 = ssub.s32 1, %s6
  %s9 = scalar_select 0, %s8, %s6
  // Predicated region
  $region2: #{patch_mlp_forward.1} parent=0 // pred_check
    _
  $region3: #{patch_mlp_forward.1} parent=0 // pred_check_branch
    %11 = sbr.rel (0) target = $region5
  $region4: #{patch_mlp_forward.1} parent=0 // pred_region
    _
  $region5: #{patch_mlp_forward.1} parent=0 // pred_fallthru
    _
  // Predicated region
  $region6: #{patch_mlp_forward.1} parent=0 // pred_check
    _
  $region7: #{patch_mlp_forward.1} parent=0 // pred_check_branch
    %13 = sbr.rel (0) target = $region9
  $region8: #{patch_mlp_forward.1} parent=0 // pred_region
    _
  $region9: #{patch_mlp_forward.1} parent=0 // pred_fallthru
    _
  // Predicated region
  $region10: #{patch_mlp_forward.1} parent=0 // pred_check
    _
  $region11: #{patch_mlp_forward.1} parent=0 // pred_check_branch
    %15 = sbr.rel (0) target = $region13
  $region12: #{patch_mlp_forward.1} parent=0 // pred_region
    _
  $region13: #{patch_mlp_forward.1} parent=0 // pred_fallthru
    _
  // Predicated region
  $region14: #{patch_mlp_forward.1} parent=0 // pred_check
    _
  $region15: #{patch_mlp_forward.1} parent=0 // pred_check_branch
    %17 = sbr.rel (0) target = $region17
  $region16: #{patch_mlp_forward.1} parent=0 // pred_region
    _
  $region17: #{patch_mlp_forward.1} parent=0 // pred_fallthru
    _
  // Predicated region
  $region18: #{patch_mlp_forward.1} parent=0 // pred_check
    _
  $region19: #{patch_mlp_forward.1} parent=0 // pred_check_branch
    %19 = sbr.rel (0) target = $region21
  $region20: #{patch_mlp_forward.1} parent=0 // pred_region
    _
  $region21: #{patch_mlp_forward.1} parent=0 // pred_fallthru
    _
  %v20 = vld [vmem:[%s0] sm:$0xff]
  %v21 = vld [vmem:[%s0 + $0x8] sm:$0xff]
  %v22 = vld [vmem:[%s1] sm:$0xff]
  %v23 = vld [vmem:[%s1 + $0x8] sm:$0xff]
  %v24 = vld [vmem:[%s1 + $0x10] sm:$0xff]
  %v25 = vld [vmem:[%s1 + $0x18] sm:$0xff]
  %v26 = vld [vmem:[%s2] sm:$0x1]
  %v28 = vlaneseq
  %v29 = vshrl.u32 %v28, 7
  %v30 = vsub.s32 0, %v29
  %v31 = vrot.slane %v26, %v30
  %vm33 = vcmask 261120
  %v35 = vsel %vm33, %v20, 0
  %v38 = vsel %vm33, %v21, 0
  %40 = vmatprep.subr.mxu0 0.0
  %41 = vmatpush1.msra.mxu0 %v22
  %42 = vmatprep.subr.mxu0 0.0
  %43 = vmatpush1.msra.mxu0 %v23
  %44 = vmatprep.subr.mxu0 0.0
  %45 = vmatpush1.msra.mxu0 %v24
  %46 = vmatprep.subr.mxu0 0.0
  %47 = vmatpush1.msra.mxu0 %v25
  %48 = vmatprep.subr.mxu0 0.0
  %49 = vmatpush1.msra.mxu0 0.0
  %50 = vmatprep.subr.mxu0 0.0
  %51 = vmatpush1.msra.mxu0 0.0
  %52 = vmatprep.subr.mxu0 0.0
  %53 = vmatpush1.msra.mxu0 0.0
  %54 = vmatprep.subr.mxu0 0.0
  %55 = vmatpush1.msra.mxu0 0.0
  %56 = vmatprep.subr.mxu0 0.0
  %57 = vmatpush1.msra.mxu0 0.0
  %58 = vmatprep.subr.mxu0 0.0
  %59 = vmatpush1.msra.mxu0 0.0
  %60 = vmatprep.subr.mxu0 0.0
  %61 = vmatpush1.msra.mxu0 0.0
  %62 = vmatprep.subr.mxu0 0.0
  %63 = vmatpush1.msra.mxu0 0.0
  %64 = vmatprep.subr.mxu0 0.0
  %65 = vmatpush1.msra.mxu0 0.0
  %66 = vmatprep.subr.mxu0 0.0
  %67 = vmatpush1.msra.mxu0 0.0
  %68 = vmatprep.subr.mxu0 0.0
  %69 = vmatpush1.msra.mxu0 0.0
  %70 = vmatprep.subr.mxu0 0.0
  %71 = vmatpush1.msra.mxu0 0.0
  %72 = vmatprep.subr.mxu0 0.0
  %73 = vmatpush1.msra.mxu0 0.0
  %74 = vmatprep.subr.mxu0 0.0
  %75 = vmatpush1.msra.mxu0 0.0
  %76 = vmatprep.subr.mxu0 0.0
  %77 = vmatpush1.msra.mxu0 0.0
  %78 = vmatprep.subr.mxu0 0.0
  %79 = vmatpush1.msra.mxu0 0.0
  %80 = vmatprep.subr.mxu0 0.0
  %81 = vmatpush1.msra.mxu0 0.0
  %82 = vmatprep.subr.mxu0 0.0
  %83 = vmatpush1.msra.mxu0 0.0
  %84 = vmatprep.subr.mxu0 0.0
  %85 = vmatpush1.msra.mxu0 0.0
  %86 = vmatprep.subr.mxu0 0.0
  %87 = vmatpush1.msra.mxu0 0.0
  %88 = vmatprep.subr.mxu0 0.0
  %89 = vmatpush1.msra.mxu0 0.0
  %90 = vmatprep.subr.mxu0 0.0
  %91 = vmatpush1.msra.mxu0 0.0
  %92 = vmatprep.subr.mxu0 0.0
  %93 = vmatpush1.msra.mxu0 0.0
  %94 = vmatprep.subr.mxu0 0.0
  %95 = vmatpush1.msra.mxu0 0.0
  %96 = vmatprep.subr.mxu0 0.0
  %97 = vmatpush1.msra.mxu0 0.0
  %98 = vmatprep.subr.mxu0 0.0
  %99 = vmatpush1.msra.mxu0 0.0
  %100 = vmatprep.subr.mxu0 0.0
  %101 = vmatpush1.msra.mxu0 0.0
  %102 = vmatprep.subr.mxu0 0.0
  %103 = vmatpush1.msra.mxu0 0.0
  %104 = vmatprep.mubr.f32.mxu0 0.0
  %105 = vmatmul.mubr.f32.gmra.mrb[0].mxu0 %v35
  %v106 = vpop.f32.mrb[0].mxu0
  %v107 = vadd.f32 %v31, %v106
  %v108 = vpop.f32.mrb[0].mxu0
  %109 = vmatprep.mubr.f32.mxu0 0.0
  %110 = vmatmul.mubr.f32.gmra.mrb[0].mxu0 %v38
  %v111 = vpop.f32.mrb[0].mxu0
  %v112 = vadd.f32 %v31, %v111
  %v113 = vpop.f32.mrb[0].mxu0
  %114 = vdwg.mxu0
  %v115 = vmax.f32 %v107, 0.0
  %v116 = vmax.f32 %v112, 0.0
  %v117 = vld [vmem:[%s3] sm:$0xff]
  %v118 = vld [vmem:[%s3 + $0x8] sm:$0xff]
  %v119 = vld [vmem:[%s3 + $0x10] sm:$0xff]
  %v120 = vld [vmem:[%s3 + $0x18] sm:$0xff]
  %v121 = vld [vmem:[%s3 + $0x20] sm:$0xff]
  %v122 = vld [vmem:[%s3 + $0x28] sm:$0xff]
  %v123 = vld [vmem:[%s3 + $0x30] sm:$0xff]
  %v124 = vld [vmem:[%s3 + $0x38] sm:$0xff]
  %v125 = vld [vmem:[%s3 + $0x40] sm:$0xff]
  %v126 = vld [vmem:[%s3 + $0x48] sm:$0xff]
  %v127 = vld [vmem:[%s3 + $0x50] sm:$0xff]
  %v128 = vld [vmem:[%s3 + $0x58] sm:$0xff]
  %v129 = vld [vmem:[%s4] sm:$0x1]
  %v131 = vlaneseq
  %v132 = vshrl.u32 %v131, 7
  %v133 = vsub.s32 0, %v132
  %v134 = vrot.slane %v129, %v133
  %vm136 = vcmask 785408
  %v138 = vsel %vm136, %v115, 0
  %v141 = vsel %vm136, %v116, 0
  %143 = vmatprep.subr.mxu0 0.0
  %144 = vmatpush1.msra.mxu0 %v117
  %145 = vmatprep.subr.mxu0 0.0
  %146 = vmatpush1.msra.mxu0 %v118
  %147 = vmatprep.subr.mxu0 0.0
  %148 = vmatpush1.msra.mxu0 %v119
  %149 = vmatprep.subr.mxu0 0.0
  %150 = vmatpush1.msra.mxu0 %v120
  %151 = vmatprep.subr.mxu0 0.0
  %152 = vmatpush1.msra.mxu0 %v121
  %153 = vmatprep.subr.mxu0 0.0
  %154 = vmatpush1.msra.mxu0 %v122
  %155 = vmatprep.subr.mxu0 0.0
  %156 = vmatpush1.msra.mxu0 %v123
  %157 = vmatprep.subr.mxu0 0.0
  %158 = vmatpush1.msra.mxu0 %v124
  %159 = vmatprep.subr.mxu0 0.0
  %160 = vmatpush1.msra.mxu0 %v125
  %161 = vmatprep.subr.mxu0 0.0
  %162 = vmatpush1.msra.mxu0 %v126
  %163 = vmatprep.subr.mxu0 0.0
  %164 = vmatpush1.msra.mxu0 %v127
  %165 = vmatprep.subr.mxu0 0.0
  %166 = vmatpush1.msra.mxu0 %v128
  %167 = vmatprep.subr.mxu0 0.0
  %168 = vmatpush1.msra.mxu0 0.0
  %169 = vmatprep.subr.mxu0 0.0
  %170 = vmatpush1.msra.mxu0 0.0
  %171 = vmatprep.subr.mxu0 0.0
  %172 = vmatpush1.msra.mxu0 0.0
  %173 = vmatprep.subr.mxu0 0.0
  %174 = vmatpush1.msra.mxu0 0.0
  %175 = vmatprep.subr.mxu0 0.0
  %176 = vmatpush1.msra.mxu0 0.0
  %177 = vmatprep.subr.mxu0 0.0
  %178 = vmatpush1.msra.mxu0 0.0
  %179 = vmatprep.subr.mxu0 0.0
  %180 = vmatpush1.msra.mxu0 0.0
  %181 = vmatprep.subr.mxu0 0.0
  %182 = vmatpush1.msra.mxu0 0.0
  %183 = vmatprep.subr.mxu0 0.0
  %184 = vmatpush1.msra.mxu0 0.0
  %185 = vmatprep.subr.mxu0 0.0
  %186 = vmatpush1.msra.mxu0 0.0
  %187 = vmatprep.subr.mxu0 0.0
  %188 = vmatpush1.msra.mxu0 0.0
  %189 = vmatprep.subr.mxu0 0.0
  %190 = vmatpush1.msra.mxu0 0.0
  %191 = vmatprep.subr.mxu0 0.0
  %192 = vmatpush1.msra.mxu0 0.0
  %193 = vmatprep.subr.mxu0 0.0
  %194 = vmatpush1.msra.mxu0 0.0
  %195 = vmatprep.subr.mxu0 0.0
  %196 = vmatpush1.msra.mxu0 0.0
  %197 = vmatprep.subr.mxu0 0.0
  %198 = vmatpush1.msra.mxu0 0.0
  %199 = vmatprep.subr.mxu0 0.0
  %200 = vmatpush1.msra.mxu0 0.0
  %201 = vmatprep.subr.mxu0 0.0
  %202 = vmatpush1.msra.mxu0 0.0
  %203 = vmatprep.subr.mxu0 0.0
  %204 = vmatpush1.msra.mxu0 0.0
  %205 = vmatprep.subr.mxu0 0.0
  %206 = vmatpush1.msra.mxu0 0.0
  %207 = vmatprep.mubr.f32.mxu0 0.0
  %208 = vmatmul.mubr.f32.gmra.mrb[0].mxu0 %v138
  %v209 = vpop.f32.mrb[0].mxu0
  %v210 = vadd.f32 %v134, %v209
  %v211 = vpop.f32.mrb[0].mxu0
  %212 = vmatprep.mubr.f32.mxu0 0.0
  %213 = vmatmul.mubr.f32.gmra.mrb[0].mxu0 %v141
  %v214 = vpop.f32.mrb[0].mxu0
  %v215 = vadd.f32 %v134, %v214
  %v216 = vpop.f32.mrb[0].mxu0
  %217 = vdwg.mxu0
  %vm218 = vcmask 64512
  %219 = vst.msk [vmem:[%s5] sm:$0xff] %vm218, %v210
  %220 = vst.msk [vmem:[%s5 + $0x8] sm:$0xff] %vm218, %v215
  // Predicated region
  $region22: #{patch_mlp_forward.1} parent=0 // pred_check
    _
  $region23: #{patch_mlp_forward.1} parent=0 // pred_check_branch
    %222 = sbr.rel (0) target = $region25
  $region24: #{patch_mlp_forward.1} parent=0 // pred_region
    _
  $region25: #{patch_mlp_forward.1} parent=0 // pred_fallthru
    _
  // Predicated region
  $region26: #{patch_mlp_forward.1} parent=0 // pred_check
    _
  $region27: #{patch_mlp_forward.1} parent=0 // pred_check_branch
    %224 = sbr.rel (0) target = $region29
  $region28: #{patch_mlp_forward.1} parent=0 // pred_region
    _
  $region29: #{patch_mlp_forward.1} parent=0 // pred_fallthru
    _

</llo_original>
